<compile_context>
chip_gen: v7x
topology: tpu7x:2x2x1
jax: 0.10.0
libtpu: 0.0.40
codegen_flags: <defaults>
</compile_context>

<pallas_src>
import functools

import jax
import jax.numpy as jnp
from jax.experimental import pallas as pl
from jax.experimental.pallas import tpu as pltpu


# ----------------------------------------------------------------------------
# Kernels
# ----------------------------------------------------------------------------

def _sincos_body(rowcoef_ref, colphase_ref, sin_ref, cos_ref):
    # rowcoef_ref/colphase_ref : (1, W*half)   rowcoef = W*angle_half tiled per w,
    #                                          colphase = w*angle_half
    # sin_ref/cos_ref          : (TH, W*half)  half-width lane-dense outputs
    TH, Whalf = sin_ref.shape
    row0 = pl.program_id(0) * TH
    h = (jax.lax.broadcasted_iota(jnp.int32, (TH, Whalf), 0) + row0).astype(jnp.float32)
    phase = h * rowcoef_ref[...] + colphase_ref[...]
    sin_ref[...] = jnp.sin(phase)
    cos_ref[...] = jnp.cos(phase)


def _sincos_kernel(rowcoef_ref, colphase_ref, sin_ref, cos_ref):
    _sincos_body(rowcoef_ref, colphase_ref, sin_ref, cos_ref)


def _fused_kernel(rowcoef_ref, colphase_ref, decay_ref,
                  sin_ref, cos_ref, mask_ref, *, W):
    # Fused: sin/cos tile + decay-mask tile for the same grid step.
    # decay_ref : (num_heads,) in SMEM
    # mask_ref  : (num_heads, TR, HW)
    _sincos_body(rowcoef_ref, colphase_ref, sin_ref, cos_ref)

    num_heads, TR, HW = mask_ref.shape
    row0 = pl.program_id(0) * TR
    w_f = jnp.float32(W)
    ri = (jax.lax.broadcasted_iota(jnp.int32, (TR, 1), 0) + row0).astype(jnp.float32)
    rj = jax.lax.broadcasted_iota(jnp.int32, (1, HW), 1).astype(jnp.float32)
    # +0.5 keeps floor robust even if f32 division is lowered via reciprocal.
    hi = jnp.floor((ri + 0.5) / w_f)
    wi = ri - hi * w_f
    hj = jnp.floor((rj + 0.5) / w_f)
    wj = rj - hj * w_f
    dist = jnp.abs(hi - hj) + jnp.abs(wi - wj)        # computed once per tile
    for n in range(num_heads):                        # unrolled; 1 vmul/head
        mask_ref[n] = dist * decay_ref[n]


# ----------------------------------------------------------------------------
# Tiling helpers
# ----------------------------------------------------------------------------

def _pick_row_tile(H, W, num_heads, *, max_block_bytes=8 << 20):
    """Row tile TR over the HW positions of the mask.

    Constraints: TR divides HW, TR % W == 0 (so the sin/cos rows of the same
    grid step align), sublane alignment for both outputs, mask block capped at
    ~8 MiB (v7x VMEM headroom); prefer >=2 grid steps (v7x dual TensorCore).
    """
    HW = H * W

    def aligned(t):
        th = t // W
        return (t % 8 == 0 or t == HW) and (th % 8 == 0 or th == H)

    cands = [t for t in range(W, HW + 1, W) if HW % t == 0 and aligned(t)]
    if not cands:
        return HW
    within = [t for t in cands if num_heads * t * HW * 4 <= max_block_bytes]
    pool = within if within else [min(cands)]
    multi = [t for t in pool if t < HW]               # >=2 grid steps if possible
    return max(multi) if multi else max(pool)


def _pick_h_tile(H, target=256):
    """Single step for small H; otherwise largest multiple of 8 dividing H."""
    if H <= target:
        return H
    t = (target // 8) * 8
    while t >= 8:
        if H % t == 0:
            return t
        t -= 8
    return H


def _phase_constants(W, angle):
    """Host-side constants for phase = h*rowcoef + colphase on half lanes."""
    # angle is pairwise-duplicated by construction: angle[2j] == angle[2j+1].
    angle_half = angle[0::2].astype(jnp.float32)
    half = angle_half.shape[0]
    rowcoef = jnp.tile(angle_half * float(W), W).reshape(1, W * half)
    colphase = (jnp.arange(W, dtype=jnp.float32)[:, None]
                * angle_half[None, :]).reshape(1, W * half)
    return rowcoef, colphase, half


def _expand_half(x_half, H, W, half):
    # pairwise duplication of the de-duplicated sin/cos lanes (tiny XLA op)
    return jnp.repeat(x_half.reshape(H, W, half), 2, axis=-1)


# ----------------------------------------------------------------------------
# pallas_call wrappers
# ----------------------------------------------------------------------------

def _fused_parallel(H, W, angle, decay):
    """sin, cos and the 2-D decay mask from a single fused pallas_call."""
    HW = H * W
    num_heads = decay.shape[0]
    rowcoef, colphase, half = _phase_constants(W, angle)
    Whalf = W * half

    TR = _pick_row_tile(H, W, num_heads)
    TH = TR // W

    kernel = functools.partial(_fused_kernel, W=W)
    sin_half, cos_half, mask = pl.pallas_call(
        kernel,
        out_shape=(jax.ShapeDtypeStruct((H, Whalf), jnp.float32),
                   jax.ShapeDtypeStruct((H, Whalf), jnp.float32),
                   jax.ShapeDtypeStruct((num_heads, HW, HW), jnp.float32)),
        grid_spec=pltpu.PrefetchScalarGridSpec(
            num_scalar_prefetch=0,
            grid=(HW // TR,),
            in_specs=[
                pl.BlockSpec((1, Whalf), lambda r: (0, 0)),
                pl.BlockSpec((1, Whalf), lambda r: (0, 0)),
                pl.BlockSpec(memory_space=pltpu.MemorySpace.SMEM),
            ],
            out_specs=(
                pl.BlockSpec((TH, Whalf), lambda r: (r, 0)),
                pl.BlockSpec((TH, Whalf), lambda r: (r, 0)),
                pl.BlockSpec((num_heads, TR, HW), lambda r: (0, r, 0)),
            ),
        ),
        compiler_params=pltpu.CompilerParams(
            dimension_semantics=("parallel",)),
    )(rowcoef, colphase, decay.astype(jnp.float32))

    sin = _expand_half(sin_half, H, W, half)
    cos = _expand_half(cos_half, H, W, half)
    return sin, cos, mask


def _sincos_2d(H, W, angle):
    """sin/cos only (used by the chunkwise path); single-step grid for small H."""
    rowcoef, colphase, half = _phase_constants(W, angle)
    Whalf = W * half
    TH = _pick_h_tile(H)

    sin_half, cos_half = pl.pallas_call(
        _sincos_kernel,
        out_shape=(jax.ShapeDtypeStruct((H, Whalf), jnp.float32),
                   jax.ShapeDtypeStruct((H, Whalf), jnp.float32)),
        grid_spec=pltpu.PrefetchScalarGridSpec(
            num_scalar_prefetch=0,
            grid=(H // TH,),
            in_specs=[
                pl.BlockSpec((1, Whalf), lambda r: (0, 0)),
                pl.BlockSpec((1, Whalf), lambda r: (0, 0)),
            ],
            out_specs=(
                pl.BlockSpec((TH, Whalf), lambda r: (r, 0)),
                pl.BlockSpec((TH, Whalf), lambda r: (r, 0)),
            ),
        ),
        compiler_params=pltpu.CompilerParams(
            dimension_semantics=("parallel",)),
    )(rowcoef, colphase)

    return _expand_half(sin_half, H, W, half), _expand_half(cos_half, H, W, half)


def _decay_mask_1d(L, decay):
    # TODO(synk): kept in plain JAX on purpose — a few-KiB mask with lane width
    # < 128 would hit masked vst.msk stores and two extra kernel launches.
    idx = jnp.arange(L, dtype=jnp.float32)
    dist = jnp.abs(idx[:, None] - idx[None, :])
    return dist[None, :, :] * decay[:, None, None]


# ----------------------------------------------------------------------------
# Module buffers + forward
# ----------------------------------------------------------------------------

def make_retnet_rel_pos_2d_params(embed_dim, num_heads, initial_value, heads_range):
    half = embed_dim // num_heads // 2
    angle = 1.0 / (10000.0 ** jnp.linspace(0.0, 1.0, half))
    angle = jnp.repeat(angle[:, None], 2, axis=1).reshape(-1)   # [a0,a0,a1,a1,...]
    decay = jnp.log(1.0 - 2.0 ** (-initial_value
                                  - heads_range * jnp.arange(num_heads, dtype=jnp.float32)
                                  / num_heads))
    return angle.astype(jnp.float32), decay.astype(jnp.float32)


def retnet_rel_pos_2d(slen, angle, decay, *, activate_recurrent=False,
                      chunkwise_recurrent=False):
    H, W = int(slen[0]), int(slen[1])
    if activate_recurrent:
        # TODO(synk): d-length sin/cos vectors + exp(decay) are scalar-scale;
        # computed in plain JAX rather than a (pointless) Pallas kernel.
        phase = angle * (H * W - 1)
        return (jnp.sin(phase), jnp.cos(phase)), jnp.exp(decay)
    if chunkwise_recurrent:
        sin, cos = _sincos_2d(H, W, angle)
        return (sin, cos), (_decay_mask_1d(H, decay), _decay_mask_1d(W, decay))
    sin, cos, mask = _fused_parallel(H, W, angle, decay)
    return (sin, cos), mask


# ----------------------------------------------------------------------------
# Pure-JAX reference (mirrors the PyTorch module)
# ----------------------------------------------------------------------------

def _reference_forward(slen, angle, decay):
    H, W = slen
    idx = jnp.arange(H * W, dtype=jnp.float32)
    phase = idx[:, None] * angle[None, :]
    sin = jnp.sin(phase).reshape(H, W, -1)
    cos = jnp.cos(phase).reshape(H, W, -1)
    ih = jnp.arange(H, dtype=jnp.float32)
    iw = jnp.arange(W, dtype=jnp.float32)
    grid = jnp.stack(jnp.meshgrid(ih, iw, indexing="ij"), axis=-1).reshape(H * W, 2)
    dist = jnp.abs(grid[:, None, :] - grid[None, :, :]).sum(-1)
    mask = dist[None, :, :] * decay[:, None, None]
    return (sin, cos), mask


def _reference_1d_decay(L, decay):
    idx = jnp.arange(L, dtype=jnp.float32)
    dist = jnp.abs(idx[:, None] - idx[None, :])
    return dist[None, :, :] * decay[:, None, None]


# ----------------------------------------------------------------------------
# Main
# ----------------------------------------------------------------------------

if __name__ == "__main__":
    # Module config (small): embed_dim=64, num_heads=4 -> d=16; slen=(16,16).
    embed_dim, num_heads = 64, 4
    initial_value, heads_range = 2.0, 4.0
    slen = (16, 16)

    # The module has no tensor inputs; its buffers are deterministic functions
    # of the config, so jax.random.PRNGKey(0) is not needed for reproducibility.
    angle, decay = make_retnet_rel_pos_2d_params(
        embed_dim, num_heads, initial_value, heads_range)

    # Default forward path (parallel mode): ((sin, cos), mask) — fused kernel.
    (sin, cos), mask = retnet_rel_pos_2d(slen, angle, decay)
    jax.block_until_ready((sin, cos, mask))

    (sin_ref, cos_ref), mask_ref = _reference_forward(slen, angle, decay)
    assert sin.shape == (16, 16, 16) and cos.shape == (16, 16, 16), (sin.shape, cos.shape)
    assert mask.shape == (num_heads, 256, 256), mask.shape
    assert jnp.allclose(sin, sin_ref, atol=1e-3, rtol=1e-3), "sin mismatch"
    assert jnp.allclose(cos, cos_ref, atol=1e-3, rtol=1e-3), "cos mismatch"
    assert jnp.allclose(mask, mask_ref, atol=1e-4, rtol=1e-4), "2d decay mask mismatch"

    # Chunkwise-recurrent path (sin/cos Pallas kernel + plain-JAX 1-D masks).
    (sin_c, cos_c), (mask_h, mask_w) = retnet_rel_pos_2d(
        slen, angle, decay, chunkwise_recurrent=True)
    jax.block_until_ready((sin_c, cos_c, mask_h, mask_w))
    assert jnp.allclose(sin_c, sin_ref, atol=1e-3, rtol=1e-3), "chunkwise sin mismatch"
    assert jnp.allclose(cos_c, cos_ref, atol=1e-3, rtol=1e-3), "chunkwise cos mismatch"
    assert jnp.allclose(mask_h, _reference_1d_decay(slen[0], decay),
                        atol=1e-4, rtol=1e-4), "1d decay (h) mismatch"
    assert jnp.allclose(mask_w, _reference_1d_decay(slen[1], decay),
                        atol=1e-4, rtol=1e-4), "1d decay (w) mismatch"

    # Recurrent path (plain JAX, scalar-scale): shape sanity only.
    (sin_r, cos_r), decay_exp = retnet_rel_pos_2d(
        slen, angle, decay, activate_recurrent=True)
    assert sin_r.shape == (embed_dim // num_heads,) and decay_exp.shape == (num_heads,)

    print("KERNEL_OK")
</pallas_src>

<mosaic_0001>
module attributes {stable_mosaic.version = 11 : i64} {
  func.func @_fused_kernel(%arg0: i32, %arg1: memref<1x128xf32, #tpu.memory_space<vmem>>, %arg2: memref<1x128xf32, #tpu.memory_space<vmem>>, %arg3: memref<4xf32, #tpu.memory_space<smem>>, %arg4: memref<8x128xf32, #tpu.memory_space<vmem>>, %arg5: memref<8x128xf32, #tpu.memory_space<vmem>>, %arg6: memref<4x128x256xf32, #tpu.memory_space<vmem>>) attributes {dimension_semantics = [#tpu.dimension_semantics<parallel>], iteration_bounds = array<i64: 2>, scalar_prefetch = 0 : i64, scratch_operands = 0 : i64, tpu.core_type = #tpu.core_type<tc>, window_params = [{pipeline_mode = #tpu.pipeline_mode<synchronous>, transform_indices = @transform_0, window_bounds = array<i64: 1, 128>}, {pipeline_mode = #tpu.pipeline_mode<synchronous>, transform_indices = @transform_1, window_bounds = array<i64: 1, 128>}, {transform_indices = @transform_2, window_bounds = array<i64: 4>}, {transform_indices = @transform_3, window_bounds = array<i64: 8, 128>}, {transform_indices = @transform_4, window_bounds = array<i64: 8, 128>}, {transform_indices = @transform_5, window_bounds = array<i64: 4, 128, 256>}]} {
    %c8_i32 = arith.constant 8 : i32
    %0 = arith.muli %arg0, %c8_i32 : i32
    %1 = tpu.iota {dimensions = array<i32: 0>} : vector<8x128xi32>
    %2 = vector.broadcast %0 : i32 to vector<8x128xi32>
    %3 = arith.addi %1, %2 : vector<8x128xi32>
    %4 = arith.sitofp %3 : vector<8x128xi32> to vector<8x128xf32>
    %c0 = arith.constant 0 : index
    %c0_0 = arith.constant 0 : index
    %5 = vector.load %arg1[%c0, %c0_0] : memref<1x128xf32, #tpu.memory_space<vmem>>, vector<1x128xf32>
    %6 = vector.broadcast %5 : vector<1x128xf32> to vector<8x128xf32>
    %7 = arith.mulf %4, %6 : vector<8x128xf32>
    %c0_1 = arith.constant 0 : index
    %c0_2 = arith.constant 0 : index
    %8 = vector.load %arg2[%c0_1, %c0_2] : memref<1x128xf32, #tpu.memory_space<vmem>>, vector<1x128xf32>
    %9 = vector.broadcast %8 : vector<1x128xf32> to vector<8x128xf32>
    %10 = arith.addf %7, %9 : vector<8x128xf32>
    %11 = math.sin %10 : vector<8x128xf32>
    %c0_3 = arith.constant 0 : index
    %c0_4 = arith.constant 0 : index
    %12 = vector.load %arg4[%c0_3, %c0_4] : memref<8x128xf32, #tpu.memory_space<vmem>>, vector<8x128xf32>
    tpu.vector_store %arg4[%c0_3, %c0_4], %11 {strides = array<i32>} : memref<8x128xf32, #tpu.memory_space<vmem>>, vector<8x128xf32>,
    %13 = math.cos %10 : vector<8x128xf32>
    %c0_5 = arith.constant 0 : index
    %c0_6 = arith.constant 0 : index
    %14 = vector.load %arg5[%c0_5, %c0_6] : memref<8x128xf32, #tpu.memory_space<vmem>>, vector<8x128xf32>
    tpu.vector_store %arg5[%c0_5, %c0_6], %13 {strides = array<i32>} : memref<8x128xf32, #tpu.memory_space<vmem>>, vector<8x128xf32>,
    %c128_i32 = arith.constant 128 : i32
    %15 = arith.muli %arg0, %c128_i32 : i32
    %16 = tpu.iota {dimensions = array<i32: 0>} : vector<128x1xi32>
    %17 = vector.broadcast %15 : i32 to vector<128x1xi32>
    %18 = arith.addi %16, %17 : vector<128x1xi32>
    %19 = arith.sitofp %18 : vector<128x1xi32> to vector<128x1xf32>
    %20 = tpu.iota {dimensions = array<i32: 1>} : vector<1x256xi32>
    %21 = arith.sitofp %20 : vector<1x256xi32> to vector<1x256xf32>
    %cst = arith.constant 5.000000e-01 : f32
    %22 = vector.broadcast %cst : f32 to vector<128x1xf32>
    %23 = arith.addf %19, %22 : vector<128x1xf32>
    %cst_7 = arith.constant 1.600000e+01 : f32
    %24 = vector.broadcast %cst_7 : f32 to vector<128x1xf32>
    %25 = arith.divf %23, %24 : vector<128x1xf32>
    %26 = math.floor %25 : vector<128x1xf32>
    %cst_8 = arith.constant 1.600000e+01 : f32
    %27 = vector.broadcast %cst_8 : f32 to vector<128x1xf32>
    %28 = arith.mulf %26, %27 : vector<128x1xf32>
    %29 = arith.subf %19, %28 : vector<128x1xf32>
    %cst_9 = arith.constant 5.000000e-01 : f32
    %30 = vector.broadcast %cst_9 : f32 to vector<1x256xf32>
    %31 = arith.addf %21, %30 : vector<1x256xf32>
    %cst_10 = arith.constant 1.600000e+01 : f32
    %32 = vector.broadcast %cst_10 : f32 to vector<1x256xf32>
    %33 = arith.divf %31, %32 : vector<1x256xf32>
    %34 = math.floor %33 : vector<1x256xf32>
    %cst_11 = arith.constant 1.600000e+01 : f32
    %35 = vector.broadcast %cst_11 : f32 to vector<1x256xf32>
    %36 = arith.mulf %34, %35 : vector<1x256xf32>
    %37 = arith.subf %21, %36 : vector<1x256xf32>
    %38 = vector.broadcast %26 : vector<128x1xf32> to vector<128x256xf32>
    %39 = vector.broadcast %34 : vector<1x256xf32> to vector<128x256xf32>
    %40 = arith.subf %38, %39 : vector<128x256xf32>
    %41 = math.absf %40 : vector<128x256xf32>
    %42 = vector.broadcast %29 : vector<128x1xf32> to vector<128x256xf32>
    %43 = vector.broadcast %37 : vector<1x256xf32> to vector<128x256xf32>
    %44 = arith.subf %42, %43 : vector<128x256xf32>
    %45 = math.absf %44 : vector<128x256xf32>
    %46 = arith.addf %41, %45 : vector<128x256xf32>
    %c0_12 = arith.constant 0 : index
    %47 = memref.load %arg3[%c0_12] : memref<4xf32, #tpu.memory_space<smem>>
    %48 = vector.broadcast %47 : f32 to vector<128x256xf32>
    %49 = arith.mulf %46, %48 : vector<128x256xf32>
    %c0_13 = arith.constant 0 : index
    %c0_14 = arith.constant 0 : index
    %c0_15 = arith.constant 0 : index
    %50 = vector.load %arg6[%c0_13, %c0_14, %c0_15] : memref<4x128x256xf32, #tpu.memory_space<vmem>>, vector<1x128x256xf32>
    %51 = vector.shape_cast %50 : vector<1x128x256xf32> to vector<128x256xf32>
    %52 = vector.shape_cast %49 : vector<128x256xf32> to vector<1x128x256xf32>
    tpu.vector_store %arg6[%c0_13, %c0_14, %c0_15], %52 {strides = array<i32>} : memref<4x128x256xf32, #tpu.memory_space<vmem>>, vector<1x128x256xf32>,
    %c1 = arith.constant 1 : index
    %53 = memref.load %arg3[%c1] : memref<4xf32, #tpu.memory_space<smem>>
    %54 = vector.broadcast %53 : f32 to vector<128x256xf32>
    %55 = arith.mulf %46, %54 : vector<128x256xf32>
    %c1_16 = arith.constant 1 : index
    %c0_17 = arith.constant 0 : index
    %c0_18 = arith.constant 0 : index
    %56 = vector.load %arg6[%c1_16, %c0_17, %c0_18] : memref<4x128x256xf32, #tpu.memory_space<vmem>>, vector<1x128x256xf32>
    %57 = vector.shape_cast %56 : vector<1x128x256xf32> to vector<128x256xf32>
    %58 = vector.shape_cast %55 : vector<128x256xf32> to vector<1x128x256xf32>
    tpu.vector_store %arg6[%c1_16, %c0_17, %c0_18], %58 {strides = array<i32>} : memref<4x128x256xf32, #tpu.memory_space<vmem>>, vector<1x128x256xf32>,
    %c2 = arith.constant 2 : index
    %59 = memref.load %arg3[%c2] : memref<4xf32, #tpu.memory_space<smem>>
    %60 = vector.broadcast %59 : f32 to vector<128x256xf32>
    %61 = arith.mulf %46, %60 : vector<128x256xf32>
    %c2_19 = arith.constant 2 : index
    %c0_20 = arith.constant 0 : index
    %c0_21 = arith.constant 0 : index
    %62 = vector.load %arg6[%c2_19, %c0_20, %c0_21] : memref<4x128x256xf32, #tpu.memory_space<vmem>>, vector<1x128x256xf32>
    %63 = vector.shape_cast %62 : vector<1x128x256xf32> to vector<128x256xf32>
    %64 = vector.shape_cast %61 : vector<128x256xf32> to vector<1x128x256xf32>
    tpu.vector_store %arg6[%c2_19, %c0_20, %c0_21], %64 {strides = array<i32>} : memref<4x128x256xf32, #tpu.memory_space<vmem>>, vector<1x128x256xf32>,
    %c3 = arith.constant 3 : index
    %65 = memref.load %arg3[%c3] : memref<4xf32, #tpu.memory_space<smem>>
    %66 = vector.broadcast %65 : f32 to vector<128x256xf32>
    %67 = arith.mulf %46, %66 : vector<128x256xf32>
    %c3_22 = arith.constant 3 : index
    %c0_23 = arith.constant 0 : index
    %c0_24 = arith.constant 0 : index
    %68 = vector.load %arg6[%c3_22, %c0_23, %c0_24] : memref<4x128x256xf32, #tpu.memory_space<vmem>>, vector<1x128x256xf32>
    %69 = vector.shape_cast %68 : vector<1x128x256xf32> to vector<128x256xf32>
    %70 = vector.shape_cast %67 : vector<128x256xf32> to vector<1x128x256xf32>
    tpu.vector_store %arg6[%c3_22, %c0_23, %c0_24], %70 {strides = array<i32>} : memref<4x128x256xf32, #tpu.memory_space<vmem>>, vector<1x128x256xf32>,
    return
  }
  func.func @transform_0(%arg0: i32) -> (i32, i32) {
    %c0_i32 = arith.constant 0 : i32
    %c0_i32_0 = arith.constant 0 : i32
    %c0_i32_1 = arith.constant 0 : i32
    return %c0_i32, %c0_i32_0 : i32, i32
  }
  func.func @transform_1(%arg0: i32) -> (i32, i32) {
    %c0_i32 = arith.constant 0 : i32
    %c0_i32_0 = arith.constant 0 : i32
    %c0_i32_1 = arith.constant 0 : i32
    return %c0_i32, %c0_i32_0 : i32, i32
  }
  func.func @transform_2(%arg0: i32) -> i32 {
    %c0_i32 = arith.constant 0 : i32
    %c0_i32_0 = arith.constant 0 : i32
    return %c0_i32 : i32
  }
  func.func @transform_3(%arg0: i32) -> (i32, i32) {
    %c0_i32 = arith.constant 0 : i32
    %c0_i32_0 = arith.constant 0 : i32
    return %arg0, %c0_i32 : i32, i32
  }
  func.func @transform_4(%arg0: i32) -> (i32, i32) {
    %c0_i32 = arith.constant 0 : i32
    %c0_i32_0 = arith.constant 0 : i32
    return %arg0, %c0_i32 : i32, i32
  }
  func.func @transform_5(%arg0: i32) -> (i32, i32, i32) {
    %c0_i32 = arith.constant 0 : i32
    %c0_i32_0 = arith.constant 0 : i32
    %c0_i32_1 = arith.constant 0 : i32
    return %c0_i32, %arg0, %c0_i32_0 : i32, i32, i32
  }
}

</mosaic_0001>

<llo_original>
// kernel: tpu_custom_call.1
$region0: #{tpu_custom_call.1}
  #allocation0 [shape = 'u32[]', space=smem, size = 0x4, offset = 0x4, fixed_abs, tag = 'smem constant byte address 0x4 - core index']
  #allocation1 [shape = 'u32[144,128]{1,0:T(1,128)}', space=vmem, size = 0x12000, scoped, tag = 'internal scratch']
  #allocation11 [shape = 's32[]', space=sflag, size = 0x4, offset = 0, fixed_abs, tag = 'sflag constant byte address 0x0 - dummy sync flag']
  %s0 = inlined_call_operand.hbm [shape: f32[1,128], index: 0, kind: input, shape index: {}]
  %s1 = inlined_call_operand.vmem [shape: f32[1,128], index: 1, kind: input, shape index: {}]
  %s2 = inlined_call_operand.vmem [shape: f32[4], index: 2, kind: input, shape index: {}]
  %s3 = inlined_call_operand.hbm [shape: f32[16,128], index: 3, kind: output, shape index: {0}]
  %s4 = inlined_call_operand.hbm [shape: f32[16,128], index: 4, kind: output, shape index: {1}]
  %s5 = inlined_call_operand.hbm [shape: f32[4,256,256], index: 5, kind: output, shape index: {2}]
  %6 = xla_tuple %s3, %s4, %s5
  %s7 = sld [smem:[#allocation0]]
  $region69: #{tpu_custom_call.1} parent=0
    _
  %s9 = ssub.s32 1, %s7
  %s10 = scalar_select 0, %s9, %s7
  $region1: #{tpu_custom_call.1} parent=0
    #allocation2 [shape = 'u8[512]{0}', space=vmem, size = 0x400, scoped, tag = 'input window, operand 0, single buffered']
    #allocation3 [shape = 's32[2]{0}', space=sflag, size = 0x8, scoped, tag = 'scoped memory for tpu_custom_call.1']
    #allocation4 [shape = 's32[2]{0}', space=sflag, size = 0x8, scoped, tag = 'scoped memory for tpu_custom_call.1']
    #allocation5 [shape = 's32[2]{0}', space=sflag, size = 0x8, scoped, tag = 'scoped memory for tpu_custom_call.1']
    #allocation6 [shape = 'u8[512]{0}', space=smem, size = 0x200, scoped, tag = 'input window, operand 2, single buffered']
    #allocation7 [shape = 'u8[8192]{0}', space=vmem, size = 0x2000, scoped, tag = 'output window, operand 0']
    #allocation8 [shape = 'u8[8192]{0}', space=vmem, size = 0x2000, scoped, tag = 'output window, operand 1']
    #allocation9 [shape = 's32[2]{0}', space=sflag, size = 0x8, scoped, tag = 'scoped memory for tpu_custom_call.1']
    #allocation10 [shape = 'u8[1048576]{0}', space=vmem, size = 0x100000, scoped, tag = 'output window, operand 2']
    %11 = vsyncpa [#allocation3], 0
    %12 = vsyncpa [#allocation5], 0
    %13 = vsyncpa [#allocation4], 0
    %s14 = scalar_lea.sflag [#allocation4], 1
    %15 = vsyncpa %s14, 0
    %16 = vsyncpa [#allocation9], 0
    %s17 = scalar_lea.sflag [#allocation9], 1
    %18 = vsyncpa %s17, 0
    loop: start=0, step=1, limit=4
    $region2: #{tpu_custom_call.1} parent=1 // loop_pre_header
      _
    $region3: #{tpu_custom_call.1} parent=1 // loop_header
      %s20 = sphi 0, %s24
      %p21 = scmp.ge.s32.totalorder %s20, 4
      %s28 = sphi 0, %s28
      %s30 = sphi 0, %s28
      %s31 = sphi 0, %s30
      %s45 = sphi 0, %s31
      %s49 = sphi 0, %s49
      %s51 = sphi 0, %s49
      %s52 = sphi 0, %s51
      %s66 = sphi 0, %s52
      %s70 = sphi 0, %s70
      %s72 = sphi 0, %s70
      %s73 = sphi 0, %s72
      %s87 = sphi 0, %s73
      %s93 = sphi 0, %s95
      %s96 = sphi 0, %s93
      %s97 = sphi 0, %s96
      %s113 = sphi 0, %s97
      %s119 = sphi 0, %s121
      %s122 = sphi 0, %s119
      %s123 = sphi 0, %s122
      %s139 = sphi 0, %s123
      %s145 = sphi 0, %s147
      %s148 = sphi 0, %s145
      %s149 = sphi 0, %s148
      %s165 = sphi 0, %s149
    $region4: #{tpu_custom_call.1} parent=1 // loop_header_branch
      %23 = sbr.rel (%p21) target = $region8
    $region5: #{tpu_custom_call.1} parent=1 // loop_body
      %s25 = ssub.s32 %s20, 1
      %s26 = ssub.s32 %s20, 2
      %s27 = sadd.s32 %s20, 1
      %s29 = sadd.s32 %s28, 1
      %p32 = scmp.eq.s32.totalorder %s20, 1
      %p33 = scmp.ne.s32.totalorder %s28, %s30
      %p34 = scmp.eq.s32.totalorder %s20, 0
      %p35 = por %p33, %p34
      %p36 = scmp.ne.s32.totalorder %s28, %s30
      %p37 = scmp.eq.s32.totalorder %s25, 1
      %p38 = por %p36, %p37
      %p39 = scmp.ne.s32.totalorder %s30, %s31
      %p40 = scmp.eq.s32.totalorder %s25, 0
      %p41 = por %p39, %p40
      %p42 = scmp.ne.s32.totalorder %s30, %s31
      %p43 = scmp.eq.s32.totalorder %s26, 1
      %p44 = por %p42, %p43
      %p46 = scmp.ne.s32.totalorder %s31, %s45
      %p47 = scmp.eq.s32.totalorder %s26, 0
      %p48 = por %p46, %p47
      %s50 = sadd.s32 %s49, 1
      %p53 = scmp.eq.s32.totalorder %s20, 1
      %p54 = scmp.ne.s32.totalorder %s49, %s51
      %p55 = scmp.eq.s32.totalorder %s20, 0
      %p56 = por %p54, %p55
      %p57 = scmp.ne.s32.totalorder %s49, %s51
      %p58 = scmp.eq.s32.totalorder %s25, 1
      %p59 = por %p57, %p58
      %p60 = scmp.ne.s32.totalorder %s51, %s52
      %p61 = scmp.eq.s32.totalorder %s25, 0
      %p62 = por %p60, %p61
      %p63 = scmp.ne.s32.totalorder %s51, %s52
      %p64 = scmp.eq.s32.totalorder %s26, 1
      %p65 = por %p63, %p64
      %p67 = scmp.ne.s32.totalorder %s52, %s66
      %p68 = scmp.eq.s32.totalorder %s26, 0
      %p69 = por %p67, %p68
      %s71 = sadd.s32 %s70, 1
      %p74 = scmp.eq.s32.totalorder %s20, 1
      %p75 = scmp.ne.s32.totalorder %s70, %s72
      %p76 = scmp.eq.s32.totalorder %s20, 0
      %p77 = por %p75, %p76
      %p78 = scmp.ne.s32.totalorder %s70, %s72
      %p79 = scmp.eq.s32.totalorder %s25, 1
      %p80 = por %p78, %p79
      %p81 = scmp.ne.s32.totalorder %s72, %s73
      %p82 = scmp.eq.s32.totalorder %s25, 0
      %p83 = por %p81, %p82
      %p84 = scmp.ne.s32.totalorder %s72, %s73
      %p85 = scmp.eq.s32.totalorder %s26, 1
      %p86 = por %p84, %p85
      %p88 = scmp.ne.s32.totalorder %s73, %s87
      %p89 = scmp.eq.s32.totalorder %s26, 0
      %p90 = por %p88, %p89
      %s91 = ssub.s32 %s20, %s27
      %p92 = scmp.eq.s32.totalorder %s91, 0
      %s94 = sadd.s32 %s93, 1
      %s95 = scalar_select %p92, %s93, %s94
      %p98 = pneg %p92
      %p99 = scmp.eq.s32.totalorder %s20, 1
      %p100 = por %p98, %p99
      %p101 = scmp.ne.s32.totalorder %s93, %s96
      %p102 = scmp.eq.s32.totalorder %s20, 0
      %p103 = por %p101, %p102
      %p104 = scmp.ne.s32.totalorder %s93, %s96
      %p105 = scmp.eq.s32.totalorder %s25, 1
      %p106 = por %p104, %p105
      %p107 = scmp.ne.s32.totalorder %s96, %s97
      %p108 = scmp.eq.s32.totalorder %s25, 0
      %p109 = por %p107, %p108
      %p110 = scmp.ne.s32.totalorder %s96, %s97
      %p111 = scmp.eq.s32.totalorder %s26, 1
      %p112 = por %p110, %p111
      %p114 = scmp.ne.s32.totalorder %s97, %s113
      %p115 = scmp.eq.s32.totalorder %s26, 0
      %p116 = por %p114, %p115
      %s117 = ssub.s32 %s20, %s27
      %p118 = scmp.eq.s32.totalorder %s117, 0
      %s120 = sadd.s32 %s119, 1
      %s121 = scalar_select %p118, %s119, %s120
      %p124 = pneg %p118
      %p125 = scmp.eq.s32.totalorder %s20, 1
      %p126 = por %p124, %p125
      %p127 = scmp.ne.s32.totalorder %s119, %s122
      %p128 = scmp.eq.s32.totalorder %s20, 0
      %p129 = por %p127, %p128
      %p130 = scmp.ne.s32.totalorder %s119, %s122
      %p131 = scmp.eq.s32.totalorder %s25, 1
      %p132 = por %p130, %p131
      %p133 = scmp.ne.s32.totalorder %s122, %s123
      %p134 = scmp.eq.s32.totalorder %s25, 0
      %p135 = por %p133, %p134
      %p136 = scmp.ne.s32.totalorder %s122, %s123
      %p137 = scmp.eq.s32.totalorder %s26, 1
      %p138 = por %p136, %p137
      %p140 = scmp.ne.s32.totalorder %s123, %s139
      %p141 = scmp.eq.s32.totalorder %s26, 0
      %p142 = por %p140, %p141
      %s143 = ssub.s32 %s20, %s27
      %p144 = scmp.eq.s32.totalorder %s143, 0
      %s146 = sadd.s32 %s145, 1
      %s147 = scalar_select %p144, %s145, %s146
      %p150 = pneg %p144
      %p151 = scmp.eq.s32.totalorder %s20, 1
      %p152 = por %p150, %p151
      %p153 = scmp.ne.s32.totalorder %s145, %s148
      %p154 = scmp.eq.s32.totalorder %s20, 0
      %p155 = por %p153, %p154
      %p156 = scmp.ne.s32.totalorder %s145, %s148
      %p157 = scmp.eq.s32.totalorder %s25, 1
      %p158 = por %p156, %p157
      %p159 = scmp.ne.s32.totalorder %s148, %s149
      %p160 = scmp.eq.s32.totalorder %s25, 0
      %p161 = por %p159, %p160
      %p162 = scmp.ne.s32.totalorder %s148, %s149
      %p163 = scmp.eq.s32.totalorder %s26, 1
      %p164 = por %p162, %p163
      %p166 = scmp.ne.s32.totalorder %s149, %s165
      %p167 = scmp.eq.s32.totalorder %s26, 0
      %p168 = por %p166, %p167
      %p169 = scmp.le.s32.totalorder 1, %s20
      %p170 = scmp.lt.s32.totalorder %s20, 3
      %p171 = pnand %p169, %p170
      %p172 = pneg %p171
      // Predicated region
      $region9: #{tpu_custom_call.1} parent=5 // pred_check
        _
      $region10: #{tpu_custom_call.1} parent=5 // pred_check_branch
        %174 = sbr.rel (%p171) target = $region12
      $region11: #{tpu_custom_call.1} parent=5 // pred_region
        %s175 = ssub.s32 %s20, 1
        // Predicated region
        $region13: #{tpu_custom_call.1} parent=11 // pred_check
          %p176 = pneg %p41
        $region14: #{tpu_custom_call.1} parent=11 // pred_check_branch
          %178 = sbr.rel (%p176) target = $region16
        $region15: #{tpu_custom_call.1} parent=11 // pred_region
          %s180 = ssub.s32 16, 16
          %181 = vsyncadd [#allocation3], %s180
          %s183 = sshll.u32 [#allocation2], 4
          %s184 = int_to_ptr.vmem [resolvable:$true] %s183
          %186 = dma.hbm_to_vmem [thread:$0]  %s0, 16, %s184, [#allocation3]
        $region16: #{tpu_custom_call.1} parent=11 // pred_fallthru
          _
        // Predicated region
        $region17: #{tpu_custom_call.1} parent=11 // pred_check
          %p187 = pneg %p62
        $region18: #{tpu_custom_call.1} parent=11 // pred_check_branch
          %189 = sbr.rel (%p187) target = $region20
        $region19: #{tpu_custom_call.1} parent=11 // pred_region
          _
        $region20: #{tpu_custom_call.1} parent=11 // pred_fallthru
          _
        // Predicated region
        $region21: #{tpu_custom_call.1} parent=11 // pred_check
          %p190 = pneg %p83
        $region22: #{tpu_custom_call.1} parent=11 // pred_check_branch
          %192 = sbr.rel (%p190) target = $region24
        $region23: #{tpu_custom_call.1} parent=11 // pred_region
          %s194 = ssub.s32 16, 16
          %195 = vsyncadd [#allocation5], %s194
          %s197 = sshll.u32 %s2, 4
          %s198 = int_to_ptr.vmem [resolvable:$true] %s197
          %200 = dma.vmem_to_smem %s198, 16, [#allocation6], [#allocation5]
        $region24: #{tpu_custom_call.1} parent=11 // pred_fallthru
          _
      $region12: #{tpu_custom_call.1} parent=5 // pred_fallthru
        _
      %p201 = scmp.lt.s32.totalorder %s20, 2
      // Predicated region
      $region25: #{tpu_custom_call.1} parent=5 // pred_check
        %p202 = pneg %p201
      $region26: #{tpu_custom_call.1} parent=5 // pred_check_branch
        %204 = sbr.rel (%p202) target = $region28
      $region27: #{tpu_custom_call.1} parent=5 // pred_region
        _
      $region28: #{tpu_custom_call.1} parent=5 // pred_fallthru
        _
      %p205 = scmp.le.s32.totalorder 1, %s20
      %p206 = scmp.lt.s32.totalorder %s20, 3
      %p207 = pnand %p205, %p206
      %p208 = pneg %p207
      // Predicated region
      $region29: #{tpu_custom_call.1} parent=5 // pred_check
        _
      $region30: #{tpu_custom_call.1} parent=5 // pred_check_branch
        %210 = sbr.rel (%p207) target = $region32
      $region31: #{tpu_custom_call.1} parent=5 // pred_region
        %s211 = ssub.s32 %s20, 1
        // Predicated region
        $region33: #{tpu_custom_call.1} parent=31 // pred_check
          %p212 = pneg %p41
        $region34: #{tpu_custom_call.1} parent=31 // pred_check_branch
          %214 = sbr.rel (%p212) target = $region36
        $region35: #{tpu_custom_call.1} parent=31 // pred_region
          %215 = dma.done [#allocation3], 16
        $region36: #{tpu_custom_call.1} parent=31 // pred_fallthru
          _
        // Predicated region
        $region37: #{tpu_custom_call.1} parent=31 // pred_check
          %p216 = pneg %p83
        $region38: #{tpu_custom_call.1} parent=31 // pred_check_branch
          %218 = sbr.rel (%p216) target = $region40
        $region39: #{tpu_custom_call.1} parent=31 // pred_region
          %219 = dma.done [#allocation5], 16
        $region40: #{tpu_custom_call.1} parent=31 // pred_fallthru
          _
        %220 = sfence
        %p221 = pneg %p41
        %p222 = pneg %p38
        %p223 = pneg %p62
        %p224 = pneg %p59
        %p225 = pneg %p83
        %p226 = pneg %p80
        %p227 = pneg %p109
        %p228 = pneg %p106
        %s229 = sand.u32 %s96, 1
        %s230 = scalar_lea.sflag [#allocation4], %s229
        %s231 = sand.u32 %s96, 1
        %s232 = smul.addr %s231, 8
        %s233 = scalar_lea.vmem [#allocation7], %s232
        %p234 = pneg %p135
        %p235 = pneg %p132
        %s236 = sand.u32 %s25, 1
        %s237 = scalar_lea.sflag [#allocation9], %s236
        %s238 = sand.u32 %s122, 1
        %s239 = smul.addr %s238, 8
        %s240 = scalar_lea.vmem [#allocation8], %s239
        %p241 = pneg %p161
        %p242 = pneg %p158
        %s243 = sand.u32 %s25, 1
        %s244 = scalar_lea.sflag [#allocation9], %s243
        %s245 = sand.u32 %s148, 1
        %s246 = smul.addr %s245, 1024
        %s247 = scalar_lea.vmem [#allocation10], %s246
        %s248 = smul.u32 16, %s25
        %s249 = smul.u32 %s25, 8
        %v250 = vlaneseq
        %v251 = vshrl.u32 %v250, 7
        %v252 = vstv %s249
        %v253 = vadd.s32 %v251, %v252
        %v254 = vcvt.s32.f32 %v253
        %v255 = vld [vmem:[#allocation2] sm:$0x1]
        %v257 = vlaneseq
        %v258 = vshrl.u32 %v257, 7
        %v259 = vsub.s32 0, %v258
        %v260 = vrot.slane %v255, %v259
        %v262 = vmul.f32 %v254, %v260
        %v263 = vld [vmem:[%s1] sm:$0x1]
        %v265 = vlaneseq
        %v266 = vshrl.u32 %v265, 7
        %v267 = vsub.s32 0, %v266
        %v268 = vrot.slane %v263, %v267
        %v270 = vadd.f32 %v262, %v268
        %v271 = vand.u32 2147483647, %v270
        %vm272 = vcmp.le.f32.partialorder %v271, 0.7853982
        %vm273 = vcmp.lt.s32.totalorder %v270, 0
        %v274 = vand.u32 %v270, 2139095040
        %v275 = vshrl.u32 %v274, 23
        %v276 = vsub.s32 %v275, 127
        %v277 = vand.u32 2147483647, %v270
        %v278 = vand.u32 %v277, 8388607
        %v279 = vor.u32 %v278, 8388608
        %v280 = vsub.s32 0, %v279
        %v281 = vadd.s32 %v276, 1
        %vm282 = vcmp.gt.s32.totalorder %v281, 0
        %v283 = vsel %vm282, %v281, 0
        %v284 = vshrl.u32 %v283, 5
        %v285 = vand.u32 %v283, 31
        %v286 = vsub.s32 32, %v285
        %v287 = vshrl.u32 683565275, %v286
        %v288 = vshll.u32 683565275, %v285
        %v289 = vshrl.u32 2475754826, %v286
        %v290 = vor.u32 %v288, %v289
        %v291 = vshll.u32 2475754826, %v285
        %v292 = vshrl.u32 2131351028, %v286
        %v293 = vor.u32 %v291, %v292
        %v294 = vshll.u32 2131351028, %v285
        %v295 = vshrl.u32 2102212464, %v286
        %v296 = vor.u32 %v294, %v295
        %v297 = vshll.u32 2102212464, %v285
        %v298 = vshrl.u32 920167782, %v286
        %v299 = vor.u32 %v297, %v298
        %v300 = vshll.u32 920167782, %v285
        %v301 = vshrl.u32 1326507024, %v286
        %v302 = vor.u32 %v300, %v301
        %vm303 = vcmp.lt.s32.totalorder %v284, 1
        %vm304 = vcmp.lt.s32.totalorder %v284, 2
        %vm305 = vcmp.lt.s32.totalorder %v284, 3
        %vm306 = vcmp.lt.s32.totalorder %v284, 4
        %v307 = vsel %vm303, %v287, %v290
        %v308 = vsel %vm306, %v296, 2102212464
        %v309 = vsel %vm305, %v293, %v308
        %v310 = vsel %vm304, %v307, %v309
        %v311 = vsel %vm303, %v290, %v293
        %v312 = vsel %vm306, %v299, 920167782
        %v313 = vsel %vm305, %v296, %v312
        %v314 = vsel %vm304, %v311, %v313
        %v315 = vsel %vm303, %v293, %v296
        %v316 = vsel %vm306, %v302, 1326507024
        %v317 = vsel %vm305, %v299, %v316
        %v318 = vsel %vm304, %v315, %v317
        %v319 = vshll.u32 %v279, 8
        %v320 = vmul.u32.u64.compose %v319, %v318
        %v321 = vextract.low.u32 %v320
        %v322 = vextract.high.u32 %v320
        %v323 = vmul.u32.u64.compose %v319, %v314
        %v324 = vextract.low.u32 %v323
        %v325 = vextract.high.u32 %v323
        %v326 = vmul.u32 %v319, %v310
        %v327 = vadd.s32 %v322, %v324
        %vm328 = vc.u32 %v322, %v324
        %v329 = vadd.s32 %v325, 1
        %v330 = vsel %vm328, %v329, %v325
        %v331 = vadd.s32 %v326, %v330
        %v332 = vadd.s32 %v331, 536870912
        %v333 = vshrl.u32 %v332, 30
        %v334 = vshll.u32 %v333, 30
        %v335 = vsub.s32 %v331, %v334
        %vm336 = vcmp.lt.s32.totalorder %v335, 0
        %v337 = vsub.s32 0, %v335
        %v338 = vsel %vm336, %v337, %v335
        %v339 = vclz %v338
        %v340 = vsub.s32 %v339, 2
        %vm341 = vcmp.gt.s32.totalorder 0, %v340
        %v342 = vsel %vm341, 0, %v340
        %v343 = vsub.s32 32, %v342
        %v344 = vshll.u32 %v335, %v342
        %v345 = vshrl.u32 %v327, %v343
        %v346 = vor.u32 %v344, %v345
        %v347 = vsub.s32 4294967266, %v342
        %v348 = vadd.s32 %v347, 127
        %v349 = vshll.u32 %v348, 23
        %v350 = vor.u32 4788187, %v349
        %v351 = vand.u32 2147483647, %v350
        %v353 = vcvt.s32.f32 %v346
        %v354 = vmul.f32 %v353, %v351
        %v355 = vxor.u32 %v354, 2147483648
        %v356 = vsel %vm273, %v355, %v354
        %v357 = vsub.s32 4, %v333
        %v358 = vsel %vm273, %v357, %v333
        %v359 = vsel %vm272, %v270, %v356
        %v360 = vsel %vm272, 0, %v358
        %v361 = vcosq.f32.pop %v359
        %v362 = vsinq.f32.pop %v359
        %vm363 = vweird.f32 %v270
        %v364 = vadd.s32 %v360, 3
        %v365 = vand.u32 %v364, 3
        %vm366 = vcmp.lt.s32.totalorder %v365, 2
        %vm367 = vcmp.eq.s32.totalorder %v365, 0
        %v368 = vxor.u32 %v362, 2147483648
        %v369 = vsel %vm367, %v361, %v368
        %vm370 = vcmp.eq.s32.totalorder %v365, 2
        %v371 = vxor.u32 %v361, 2147483648
        %v372 = vsel %vm370, %v371, %v362
        %v373 = vsel %vm366, %v369, %v372
        %v374 = vsel %vm363, nan, %v373
        %375 = vst [vmem:[%s233] sm:$0xff] %v374
        %v376 = vand.u32 2147483647, %v270
        %vm377 = vcmp.le.f32.partialorder %v376, 0.7853982
        %vm378 = vcmp.lt.s32.totalorder %v270, 0
        %v379 = vand.u32 %v270, 2139095040
        %v380 = vshrl.u32 %v379, 23
        %v381 = vsub.s32 %v380, 127
        %v382 = vand.u32 2147483647, %v270
        %v383 = vand.u32 %v382, 8388607
        %v384 = vor.u32 %v383, 8388608
        %v385 = vsub.s32 0, %v384
        %v386 = vadd.s32 %v381, 1
        %vm387 = vcmp.gt.s32.totalorder %v386, 0
        %v388 = vsel %vm387, %v386, 0
        %v389 = vshrl.u32 %v388, 5
        %v390 = vand.u32 %v388, 31
        %v391 = vsub.s32 32, %v390
        %v392 = vshrl.u32 683565275, %v391
        %v393 = vshll.u32 683565275, %v390
        %v394 = vshrl.u32 2475754826, %v391
        %v395 = vor.u32 %v393, %v394
        %v396 = vshll.u32 2475754826, %v390
        %v397 = vshrl.u32 2131351028, %v391
        %v398 = vor.u32 %v396, %v397
        %v399 = vshll.u32 2131351028, %v390
        %v400 = vshrl.u32 2102212464, %v391
        %v401 = vor.u32 %v399, %v400
        %v402 = vshll.u32 2102212464, %v390
        %v403 = vshrl.u32 920167782, %v391
        %v404 = vor.u32 %v402, %v403
        %v405 = vshll.u32 920167782, %v390
        %v406 = vshrl.u32 1326507024, %v391
        %v407 = vor.u32 %v405, %v406
        %vm408 = vcmp.lt.s32.totalorder %v389, 1
        %vm409 = vcmp.lt.s32.totalorder %v389, 2
        %vm410 = vcmp.lt.s32.totalorder %v389, 3
        %vm411 = vcmp.lt.s32.totalorder %v389, 4
        %v412 = vsel %vm408, %v392, %v395
        %v413 = vsel %vm411, %v401, 2102212464
        %v414 = vsel %vm410, %v398, %v413
        %v415 = vsel %vm409, %v412, %v414
        %v416 = vsel %vm408, %v395, %v398
        %v417 = vsel %vm411, %v404, 920167782
        %v418 = vsel %vm410, %v401, %v417
        %v419 = vsel %vm409, %v416, %v418
        %v420 = vsel %vm408, %v398, %v401
        %v421 = vsel %vm411, %v407, 1326507024
        %v422 = vsel %vm410, %v404, %v421
        %v423 = vsel %vm409, %v420, %v422
        %v424 = vshll.u32 %v384, 8
        %v425 = vmul.u32.u64.compose %v424, %v423
        %v426 = vextract.low.u32 %v425
        %v427 = vextract.high.u32 %v425
        %v428 = vmul.u32.u64.compose %v424, %v419
        %v429 = vextract.low.u32 %v428
        %v430 = vextract.high.u32 %v428
        %v431 = vmul.u32 %v424, %v415
        %v432 = vadd.s32 %v427, %v429
        %vm433 = vc.u32 %v427, %v429
        %v434 = vadd.s32 %v430, 1
        %v435 = vsel %vm433, %v434, %v430
        %v436 = vadd.s32 %v431, %v435
        %v437 = vadd.s32 %v436, 536870912
        %v438 = vshrl.u32 %v437, 30
        %v439 = vshll.u32 %v438, 30
        %v440 = vsub.s32 %v436, %v439
        %vm441 = vcmp.lt.s32.totalorder %v440, 0
        %v442 = vsub.s32 0, %v440
        %v443 = vsel %vm441, %v442, %v440
        %v444 = vclz %v443
        %v445 = vsub.s32 %v444, 2
        %vm446 = vcmp.gt.s32.totalorder 0, %v445
        %v447 = vsel %vm446, 0, %v445
        %v448 = vsub.s32 32, %v447
        %v449 = vshll.u32 %v440, %v447
        %v450 = vshrl.u32 %v432, %v448
        %v451 = vor.u32 %v449, %v450
        %v452 = vsub.s32 4294967266, %v447
        %v453 = vadd.s32 %v452, 127
        %v454 = vshll.u32 %v453, 23
        %v455 = vor.u32 4788187, %v454
        %v456 = vand.u32 2147483647, %v455
        %v458 = vcvt.s32.f32 %v451
        %v459 = vmul.f32 %v458, %v456
        %v460 = vxor.u32 %v459, 2147483648
        %v461 = vsel %vm378, %v460, %v459
        %v462 = vsub.s32 4, %v438
        %v463 = vsel %vm378, %v462, %v438
        %v464 = vsel %vm377, %v270, %v461
        %v465 = vsel %vm377, 0, %v463
        %v466 = vcosq.f32.pop %v464
        %v467 = vsinq.f32.pop %v464
        %vm468 = vweird.f32 %v270
        %v469 = vand.u32 %v465, 3
        %vm470 = vcmp.lt.s32.totalorder %v469, 2
        %vm471 = vcmp.eq.s32.totalorder %v469, 0
        %v472 = vxor.u32 %v467, 2147483648
        %v473 = vsel %vm471, %v466, %v472
        %vm474 = vcmp.eq.s32.totalorder %v469, 2
        %v475 = vxor.u32 %v466, 2147483648
        %v476 = vsel %vm474, %v475, %v467
        %v477 = vsel %vm470, %v473, %v476
        %v478 = vsel %vm468, nan, %v477
        %479 = vst [vmem:[%s240] sm:$0xff] %v478
        %s480 = smul.u32 %s25, 128
        %v481 = vadd.s32 %v251, 8
        %v482 = vadd.s32 %v251, 16
        %v483 = vadd.s32 %v251, 24
        %v484 = vadd.s32 %v251, 32
        %v485 = vadd.s32 %v251, 40
        %v486 = vadd.s32 %v251, 48
        %v487 = vadd.s32 %v251, 56
        %v488 = vadd.s32 %v251, 64
        %v489 = vadd.s32 %v251, 72
        %v490 = vadd.s32 %v251, 80
        %v491 = vadd.s32 %v251, 88
        %v492 = vadd.s32 %v251, 96
        %v493 = vadd.s32 %v251, 104
        %v494 = vadd.s32 %v251, 112
        %v495 = vadd.s32 %v251, 120
        %v496 = vstv %s480
        %v497 = vadd.s32 %v251, %v496
        %v498 = vadd.s32 %v481, %v496
        %v499 = vadd.s32 %v482, %v496
        %v500 = vadd.s32 %v483, %v496
        %v501 = vadd.s32 %v484, %v496
        %v502 = vadd.s32 %v485, %v496
        %v503 = vadd.s32 %v486, %v496
        %v504 = vadd.s32 %v487, %v496
        %v505 = vadd.s32 %v488, %v496
        %v506 = vadd.s32 %v489, %v496
        %v507 = vadd.s32 %v490, %v496
        %v508 = vadd.s32 %v491, %v496
        %v509 = vadd.s32 %v492, %v496
        %v510 = vadd.s32 %v493, %v496
        %v511 = vadd.s32 %v494, %v496
        %v512 = vadd.s32 %v495, %v496
        %v513 = vcvt.s32.f32 %v497
        %v514 = vcvt.s32.f32 %v498
        %v515 = vcvt.s32.f32 %v499
        %v516 = vcvt.s32.f32 %v500
        %v517 = vcvt.s32.f32 %v501
        %v518 = vcvt.s32.f32 %v502
        %v519 = vcvt.s32.f32 %v503
        %v520 = vcvt.s32.f32 %v504
        %v521 = vcvt.s32.f32 %v505
        %v522 = vcvt.s32.f32 %v506
        %v523 = vcvt.s32.f32 %v507
        %v524 = vcvt.s32.f32 %v508
        %v525 = vcvt.s32.f32 %v509
        %v526 = vcvt.s32.f32 %v510
        %v527 = vcvt.s32.f32 %v511
        %v528 = vcvt.s32.f32 %v512
        %v529 = vlaneseq
        %v530 = vand.u32 %v529, 127
        %v531 = vadd.s32 %v530, 128
        %v532 = vcvt.s32.f32 %v530
        %v533 = vcvt.s32.f32 %v531
        %v534 = vadd.f32 %v513, 0.5
        %v535 = vadd.f32 %v514, 0.5
        %v536 = vadd.f32 %v515, 0.5
        %v537 = vadd.f32 %v516, 0.5
        %v538 = vadd.f32 %v517, 0.5
        %v539 = vadd.f32 %v518, 0.5
        %v540 = vadd.f32 %v519, 0.5
        %v541 = vadd.f32 %v520, 0.5
        %v542 = vadd.f32 %v521, 0.5
        %v543 = vadd.f32 %v522, 0.5
        %v544 = vadd.f32 %v523, 0.5
        %v545 = vadd.f32 %v524, 0.5
        %v546 = vadd.f32 %v525, 0.5
        %v547 = vadd.f32 %v526, 0.5
        %v548 = vadd.f32 %v527, 0.5
        %v549 = vadd.f32 %v528, 0.5
        %v550 = vrcp.pop 16.0
        %v551 = vmul.f32 %v534, %v550
        %v552 = vmul.f32 %v535, %v550
        %v553 = vmul.f32 %v536, %v550
        %v554 = vmul.f32 %v537, %v550
        %v555 = vmul.f32 %v538, %v550
        %v556 = vmul.f32 %v539, %v550
        %v557 = vmul.f32 %v540, %v550
        %v558 = vmul.f32 %v541, %v550
        %v559 = vmul.f32 %v542, %v550
        %v560 = vmul.f32 %v543, %v550
        %v561 = vmul.f32 %v544, %v550
        %v562 = vmul.f32 %v545, %v550
        %v563 = vmul.f32 %v546, %v550
        %v564 = vmul.f32 %v547, %v550
        %v565 = vmul.f32 %v548, %v550
        %v566 = vmul.f32 %v549, %v550
        %v567 = vfloor.f32 %v551
        %v568 = vfloor.f32 %v552
        %v569 = vfloor.f32 %v553
        %v570 = vfloor.f32 %v554
        %v571 = vfloor.f32 %v555
        %v572 = vfloor.f32 %v556
        %v573 = vfloor.f32 %v557
        %v574 = vfloor.f32 %v558
        %v575 = vfloor.f32 %v559
        %v576 = vfloor.f32 %v560
        %v577 = vfloor.f32 %v561
        %v578 = vfloor.f32 %v562
        %v579 = vfloor.f32 %v563
        %v580 = vfloor.f32 %v564
        %v581 = vfloor.f32 %v565
        %v582 = vfloor.f32 %v566
        %v583 = vmul.f32 %v567, 16.0
        %v584 = vmul.f32 %v568, 16.0
        %v585 = vmul.f32 %v569, 16.0
        %v586 = vmul.f32 %v570, 16.0
        %v587 = vmul.f32 %v571, 16.0
        %v588 = vmul.f32 %v572, 16.0
        %v589 = vmul.f32 %v573, 16.0
        %v590 = vmul.f32 %v574, 16.0
        %v591 = vmul.f32 %v575, 16.0
        %v592 = vmul.f32 %v576, 16.0
        %v593 = vmul.f32 %v577, 16.0
        %v594 = vmul.f32 %v578, 16.0
        %v595 = vmul.f32 %v579, 16.0
        %v596 = vmul.f32 %v580, 16.0
        %v597 = vmul.f32 %v581, 16.0
        %v598 = vmul.f32 %v582, 16.0
        %v599 = vsub.f32 %v513, %v583
        %v600 = vsub.f32 %v514, %v584
        %v601 = vsub.f32 %v515, %v585
        %v602 = vsub.f32 %v516, %v586
        %v603 = vsub.f32 %v517, %v587
        %v604 = vsub.f32 %v518, %v588
        %v605 = vsub.f32 %v519, %v589
        %v606 = vsub.f32 %v520, %v590
        %v607 = vsub.f32 %v521, %v591
        %v608 = vsub.f32 %v522, %v592
        %v609 = vsub.f32 %v523, %v593
        %v610 = vsub.f32 %v524, %v594
        %v611 = vsub.f32 %v525, %v595
        %v612 = vsub.f32 %v526, %v596
        %v613 = vsub.f32 %v527, %v597
        %v614 = vsub.f32 %v528, %v598
        %v615 = vadd.f32 %v532, 0.5
        %v616 = vadd.f32 %v533, 0.5
        %v617 = vmul.f32 %v615, %v550
        %v618 = vmul.f32 %v616, %v550
        %v619 = vfloor.f32 %v617
        %v620 = vfloor.f32 %v618
        %v621 = vmul.f32 %v619, 16.0
        %v622 = vmul.f32 %v620, 16.0
        %v623 = vsub.f32 %v532, %v621
        %v624 = vsub.f32 %v533, %v622
        %v625 = vsub.f32 %v567, %v619
        %v626 = vsub.f32 %v567, %v620
        %v627 = vsub.f32 %v568, %v619
        %v628 = vsub.f32 %v568, %v620
        %v629 = vsub.f32 %v569, %v619
        %v630 = vsub.f32 %v569, %v620
        %v631 = vsub.f32 %v570, %v619
        %v632 = vsub.f32 %v570, %v620
        %v633 = vsub.f32 %v571, %v619
        %v634 = vsub.f32 %v571, %v620
        %v635 = vsub.f32 %v572, %v619
        %v636 = vsub.f32 %v572, %v620
        %v637 = vsub.f32 %v573, %v619
        %v638 = vsub.f32 %v573, %v620
        %v639 = vsub.f32 %v574, %v619
        %v640 = vsub.f32 %v574, %v620
        %v641 = vsub.f32 %v575, %v619
        %v642 = vsub.f32 %v575, %v620
        %v643 = vsub.f32 %v576, %v619
        %v644 = vsub.f32 %v576, %v620
        %v645 = vsub.f32 %v577, %v619
        %v646 = vsub.f32 %v577, %v620
        %v647 = vsub.f32 %v578, %v619
        %v648 = vsub.f32 %v578, %v620
        %v649 = vsub.f32 %v579, %v619
        %v650 = vsub.f32 %v579, %v620
        %v651 = vsub.f32 %v580, %v619
        %v652 = vsub.f32 %v580, %v620
        %v653 = vsub.f32 %v581, %v619
        %v654 = vsub.f32 %v581, %v620
        %v655 = vsub.f32 %v582, %v619
        %v656 = vsub.f32 %v582, %v620
        %v657 = vand.u32 2147483647, %v625
        %v658 = vand.u32 2147483647, %v626
        %v659 = vand.u32 2147483647, %v627
        %v660 = vand.u32 2147483647, %v628
        %v661 = vand.u32 2147483647, %v629
        %v662 = vand.u32 2147483647, %v630
        %v663 = vand.u32 2147483647, %v631
        %v664 = vand.u32 2147483647, %v632
        %v665 = vand.u32 2147483647, %v633
        %v666 = vand.u32 2147483647, %v634
        %v667 = vand.u32 2147483647, %v635
        %v668 = vand.u32 2147483647, %v636
        %v669 = vand.u32 2147483647, %v637
        %v670 = vand.u32 2147483647, %v638
        %v671 = vand.u32 2147483647, %v639
        %v672 = vand.u32 2147483647, %v640
        %v673 = vand.u32 2147483647, %v641
        %v674 = vand.u32 2147483647, %v642
        %v675 = vand.u32 2147483647, %v643
        %v676 = vand.u32 2147483647, %v644
        %v677 = vand.u32 2147483647, %v645
        %v678 = vand.u32 2147483647, %v646
        %v679 = vand.u32 2147483647, %v647
        %v680 = vand.u32 2147483647, %v648
        %v681 = vand.u32 2147483647, %v649
        %v682 = vand.u32 2147483647, %v650
        %v683 = vand.u32 2147483647, %v651
        %v684 = vand.u32 2147483647, %v652
        %v685 = vand.u32 2147483647, %v653
        %v686 = vand.u32 2147483647, %v654
        %v687 = vand.u32 2147483647, %v655
        %v688 = vand.u32 2147483647, %v656
        %v689 = vsub.f32 %v599, %v623
        %v690 = vsub.f32 %v599, %v624
        %v691 = vsub.f32 %v600, %v623
        %v692 = vsub.f32 %v600, %v624
        %v693 = vsub.f32 %v601, %v623
        %v694 = vsub.f32 %v601, %v624
        %v695 = vsub.f32 %v602, %v623
        %v696 = vsub.f32 %v602, %v624
        %v697 = vsub.f32 %v603, %v623
        %v698 = vsub.f32 %v603, %v624
        %v699 = vsub.f32 %v604, %v623
        %v700 = vsub.f32 %v604, %v624
        %v701 = vsub.f32 %v605, %v623
        %v702 = vsub.f32 %v605, %v624
        %v703 = vsub.f32 %v606, %v623
        %v704 = vsub.f32 %v606, %v624
        %v705 = vsub.f32 %v607, %v623
        %v706 = vsub.f32 %v607, %v624
        %v707 = vsub.f32 %v608, %v623
        %v708 = vsub.f32 %v608, %v624
        %v709 = vsub.f32 %v609, %v623
        %v710 = vsub.f32 %v609, %v624
        %v711 = vsub.f32 %v610, %v623
        %v712 = vsub.f32 %v610, %v624
        %v713 = vsub.f32 %v611, %v623
        %v714 = vsub.f32 %v611, %v624
        %v715 = vsub.f32 %v612, %v623
        %v716 = vsub.f32 %v612, %v624
        %v717 = vsub.f32 %v613, %v623
        %v718 = vsub.f32 %v613, %v624
        %v719 = vsub.f32 %v614, %v623
        %v720 = vsub.f32 %v614, %v624
        %v721 = vand.u32 2147483647, %v689
        %v722 = vand.u32 2147483647, %v690
        %v723 = vand.u32 2147483647, %v691
        %v724 = vand.u32 2147483647, %v692
        %v725 = vand.u32 2147483647, %v693
        %v726 = vand.u32 2147483647, %v694
        %v727 = vand.u32 2147483647, %v695
        %v728 = vand.u32 2147483647, %v696
        %v729 = vand.u32 2147483647, %v697
        %v730 = vand.u32 2147483647, %v698
        %v731 = vand.u32 2147483647, %v699
        %v732 = vand.u32 2147483647, %v700
        %v733 = vand.u32 2147483647, %v701
        %v734 = vand.u32 2147483647, %v702
        %v735 = vand.u32 2147483647, %v703
        %v736 = vand.u32 2147483647, %v704
        %v737 = vand.u32 2147483647, %v705
        %v738 = vand.u32 2147483647, %v706
        %v739 = vand.u32 2147483647, %v707
        %v740 = vand.u32 2147483647, %v708
        %v741 = vand.u32 2147483647, %v709
        %v742 = vand.u32 2147483647, %v710
        %v743 = vand.u32 2147483647, %v711
        %v744 = vand.u32 2147483647, %v712
        %v745 = vand.u32 2147483647, %v713
        %v746 = vand.u32 2147483647, %v714
        %v747 = vand.u32 2147483647, %v715
        %v748 = vand.u32 2147483647, %v716
        %v749 = vand.u32 2147483647, %v717
        %v750 = vand.u32 2147483647, %v718
        %v751 = vand.u32 2147483647, %v719
        %v752 = vand.u32 2147483647, %v720
        %v753 = vadd.f32 %v657, %v721
        %v754 = vadd.f32 %v658, %v722
        %v755 = vadd.f32 %v659, %v723
        %v756 = vadd.f32 %v660, %v724
        %v757 = vadd.f32 %v661, %v725
        %v758 = vadd.f32 %v662, %v726
        %v759 = vadd.f32 %v663, %v727
        %v760 = vadd.f32 %v664, %v728
        %v761 = vadd.f32 %v665, %v729
        %v762 = vadd.f32 %v666, %v730
        %v763 = vadd.f32 %v667, %v731
        %v764 = vadd.f32 %v668, %v732
        %v765 = vadd.f32 %v669, %v733
        %v766 = vadd.f32 %v670, %v734
        %v767 = vadd.f32 %v671, %v735
        %v768 = vadd.f32 %v672, %v736
        %v769 = vadd.f32 %v673, %v737
        %v770 = vadd.f32 %v674, %v738
        %v771 = vadd.f32 %v675, %v739
        %v772 = vadd.f32 %v676, %v740
        %v773 = vadd.f32 %v677, %v741
        %v774 = vadd.f32 %v678, %v742
        %v775 = vadd.f32 %v679, %v743
        %v776 = vadd.f32 %v680, %v744
        %v777 = vadd.f32 %v681, %v745
        %v778 = vadd.f32 %v682, %v746
        %v779 = vadd.f32 %v683, %v747
        %v780 = vadd.f32 %v684, %v748
        %v781 = vadd.f32 %v685, %v749
        %v782 = vadd.f32 %v686, %v750
        %v783 = vadd.f32 %v687, %v751
        %v784 = vadd.f32 %v688, %v752
        %s785 = sld [smem:[#allocation6]]
        %v786 = vstv %s785
        %v787 = vmul.f32 %v753, %v786
        %v788 = vmul.f32 %v754, %v786
        %v789 = vmul.f32 %v755, %v786
        %v790 = vmul.f32 %v756, %v786
        %v791 = vmul.f32 %v757, %v786
        %v792 = vmul.f32 %v758, %v786
        %v793 = vmul.f32 %v759, %v786
        %v794 = vmul.f32 %v760, %v786
        %v795 = vmul.f32 %v761, %v786
        %v796 = vmul.f32 %v762, %v786
        %v797 = vmul.f32 %v763, %v786
        %v798 = vmul.f32 %v764, %v786
        %v799 = vmul.f32 %v765, %v786
        %v800 = vmul.f32 %v766, %v786
        %v801 = vmul.f32 %v767, %v786
        %v802 = vmul.f32 %v768, %v786
        %v803 = vmul.f32 %v769, %v786
        %v804 = vmul.f32 %v770, %v786
        %v805 = vmul.f32 %v771, %v786
        %v806 = vmul.f32 %v772, %v786
        %v807 = vmul.f32 %v773, %v786
        %v808 = vmul.f32 %v774, %v786
        %v809 = vmul.f32 %v775, %v786
        %v810 = vmul.f32 %v776, %v786
        %v811 = vmul.f32 %v777, %v786
        %v812 = vmul.f32 %v778, %v786
        %v813 = vmul.f32 %v779, %v786
        %v814 = vmul.f32 %v780, %v786
        %v815 = vmul.f32 %v781, %v786
        %v816 = vmul.f32 %v782, %v786
        %v817 = vmul.f32 %v783, %v786
        %v818 = vmul.f32 %v784, %v786
        %819 = vst [vmem:[%s247] sm:$0xff] %v787
        %820 = vst [vmem:[%s247 + $0x8] sm:$0xff] %v788
        %821 = vst [vmem:[%s247 + $0x10] sm:$0xff] %v789
        %822 = vst [vmem:[%s247 + $0x18] sm:$0xff] %v790
        %823 = vst [vmem:[%s247 + $0x20] sm:$0xff] %v791
        %824 = vst [vmem:[%s247 + $0x28] sm:$0xff] %v792
        %825 = vst [vmem:[%s247 + $0x30] sm:$0xff] %v793
        %826 = vst [vmem:[%s247 + $0x38] sm:$0xff] %v794
        %827 = vst [vmem:[%s247 + $0x40] sm:$0xff] %v795
        %828 = vst [vmem:[%s247 + $0x48] sm:$0xff] %v796
        %829 = vst [vmem:[%s247 + $0x50] sm:$0xff] %v797
        %830 = vst [vmem:[%s247 + $0x58] sm:$0xff] %v798
        %831 = vst [vmem:[%s247 + $0x60] sm:$0xff] %v799
        %832 = vst [vmem:[%s247 + $0x68] sm:$0xff] %v800
        %833 = vst [vmem:[%s247 + $0x70] sm:$0xff] %v801
        %834 = vst [vmem:[%s247 + $0x78] sm:$0xff] %v802
        %835 = vst [vmem:[%s247 + $0x80] sm:$0xff] %v803
        %836 = vst [vmem:[%s247 + $0x88] sm:$0xff] %v804
        %837 = vst [vmem:[%s247 + $0x90] sm:$0xff] %v805
        %838 = vst [vmem:[%s247 + $0x98] sm:$0xff] %v806
        %839 = vst [vmem:[%s247 + $0xa0] sm:$0xff] %v807
        %840 = vst [vmem:[%s247 + $0xa8] sm:$0xff] %v808
        %841 = vst [vmem:[%s247 + $0xb0] sm:$0xff] %v809
        %842 = vst [vmem:[%s247 + $0xb8] sm:$0xff] %v810
        %843 = vst [vmem:[%s247 + $0xc0] sm:$0xff] %v811
        %844 = vst [vmem:[%s247 + $0xc8] sm:$0xff] %v812
        %845 = vst [vmem:[%s247 + $0xd0] sm:$0xff] %v813
        %846 = vst [vmem:[%s247 + $0xd8] sm:$0xff] %v814
        %847 = vst [vmem:[%s247 + $0xe0] sm:$0xff] %v815
        %848 = vst [vmem:[%s247 + $0xe8] sm:$0xff] %v816
        %849 = vst [vmem:[%s247 + $0xf0] sm:$0xff] %v817
        %850 = vst [vmem:[%s247 + $0xf8] sm:$0xff] %v818
        %s851 = sld [smem:[#allocation6 + $0x1]]
        %v852 = vstv %s851
        %v853 = vmul.f32 %v753, %v852
        %v854 = vmul.f32 %v754, %v852
        %v855 = vmul.f32 %v755, %v852
        %v856 = vmul.f32 %v756, %v852
        %v857 = vmul.f32 %v757, %v852
        %v858 = vmul.f32 %v758, %v852
        %v859 = vmul.f32 %v759, %v852
        %v860 = vmul.f32 %v760, %v852
        %v861 = vmul.f32 %v761, %v852
        %v862 = vmul.f32 %v762, %v852
        %v863 = vmul.f32 %v763, %v852
        %v864 = vmul.f32 %v764, %v852
        %v865 = vmul.f32 %v765, %v852
        %v866 = vmul.f32 %v766, %v852
        %v867 = vmul.f32 %v767, %v852
        %v868 = vmul.f32 %v768, %v852
        %v869 = vmul.f32 %v769, %v852
        %v870 = vmul.f32 %v770, %v852
        %v871 = vmul.f32 %v771, %v852
        %v872 = vmul.f32 %v772, %v852
        %v873 = vmul.f32 %v773, %v852
        %v874 = vmul.f32 %v774, %v852
        %v875 = vmul.f32 %v775, %v852
        %v876 = vmul.f32 %v776, %v852
        %v877 = vmul.f32 %v777, %v852
        %v878 = vmul.f32 %v778, %v852
        %v879 = vmul.f32 %v779, %v852
        %v880 = vmul.f32 %v780, %v852
        %v881 = vmul.f32 %v781, %v852
        %v882 = vmul.f32 %v782, %v852
        %v883 = vmul.f32 %v783, %v852
        %v884 = vmul.f32 %v784, %v852
        %s885 = scalar_lea.vmem %s247, 256 [#allocation10]
        %886 = vst [vmem:[%s885] sm:$0xff] %v853
        %887 = vst [vmem:[%s885 + $0x8] sm:$0xff] %v854
        %888 = vst [vmem:[%s885 + $0x10] sm:$0xff] %v855
        %889 = vst [vmem:[%s885 + $0x18] sm:$0xff] %v856
        %890 = vst [vmem:[%s885 + $0x20] sm:$0xff] %v857
        %891 = vst [vmem:[%s885 + $0x28] sm:$0xff] %v858
        %892 = vst [vmem:[%s885 + $0x30] sm:$0xff] %v859
        %893 = vst [vmem:[%s885 + $0x38] sm:$0xff] %v860
        %894 = vst [vmem:[%s885 + $0x40] sm:$0xff] %v861
        %895 = vst [vmem:[%s885 + $0x48] sm:$0xff] %v862
        %896 = vst [vmem:[%s885 + $0x50] sm:$0xff] %v863
        %897 = vst [vmem:[%s885 + $0x58] sm:$0xff] %v864
        %898 = vst [vmem:[%s885 + $0x60] sm:$0xff] %v865
        %899 = vst [vmem:[%s885 + $0x68] sm:$0xff] %v866
        %900 = vst [vmem:[%s885 + $0x70] sm:$0xff] %v867
        %901 = vst [vmem:[%s885 + $0x78] sm:$0xff] %v868
        %902 = vst [vmem:[%s885 + $0x80] sm:$0xff] %v869
        %903 = vst [vmem:[%s885 + $0x88] sm:$0xff] %v870
        %904 = vst [vmem:[%s885 + $0x90] sm:$0xff] %v871
        %905 = vst [vmem:[%s885 + $0x98] sm:$0xff] %v872
        %906 = vst [vmem:[%s885 + $0xa0] sm:$0xff] %v873
        %907 = vst [vmem:[%s885 + $0xa8] sm:$0xff] %v874
        %908 = vst [vmem:[%s885 + $0xb0] sm:$0xff] %v875
        %909 = vst [vmem:[%s885 + $0xb8] sm:$0xff] %v876
        %910 = vst [vmem:[%s885 + $0xc0] sm:$0xff] %v877
        %911 = vst [vmem:[%s885 + $0xc8] sm:$0xff] %v878
        %912 = vst [vmem:[%s885 + $0xd0] sm:$0xff] %v879
        %913 = vst [vmem:[%s885 + $0xd8] sm:$0xff] %v880
        %914 = vst [vmem:[%s885 + $0xe0] sm:$0xff] %v881
        %915 = vst [vmem:[%s885 + $0xe8] sm:$0xff] %v882
        %916 = vst [vmem:[%s885 + $0xf0] sm:$0xff] %v883
        %917 = vst [vmem:[%s885 + $0xf8] sm:$0xff] %v884
        %s918 = sld [smem:[#allocation6 + $0x2]]
        %v919 = vstv %s918
        %v920 = vmul.f32 %v753, %v919
        %v921 = vmul.f32 %v754, %v919
        %v922 = vmul.f32 %v755, %v919
        %v923 = vmul.f32 %v756, %v919
        %v924 = vmul.f32 %v757, %v919
        %v925 = vmul.f32 %v758, %v919
        %v926 = vmul.f32 %v759, %v919
        %v927 = vmul.f32 %v760, %v919
        %v928 = vmul.f32 %v761, %v919
        %v929 = vmul.f32 %v762, %v919
        %v930 = vmul.f32 %v763, %v919
        %v931 = vmul.f32 %v764, %v919
        %v932 = vmul.f32 %v765, %v919
        %v933 = vmul.f32 %v766, %v919
        %v934 = vmul.f32 %v767, %v919
        %v935 = vmul.f32 %v768, %v919
        %v936 = vmul.f32 %v769, %v919
        %v937 = vmul.f32 %v770, %v919
        %v938 = vmul.f32 %v771, %v919
        %v939 = vmul.f32 %v772, %v919
        %v940 = vmul.f32 %v773, %v919
        %v941 = vmul.f32 %v774, %v919
        %v942 = vmul.f32 %v775, %v919
        %v943 = vmul.f32 %v776, %v919
        %v944 = vmul.f32 %v777, %v919
        %v945 = vmul.f32 %v778, %v919
        %v946 = vmul.f32 %v779, %v919
        %v947 = vmul.f32 %v780, %v919
        %v948 = vmul.f32 %v781, %v919
        %v949 = vmul.f32 %v782, %v919
        %v950 = vmul.f32 %v783, %v919
        %v951 = vmul.f32 %v784, %v919
        %s952 = scalar_lea.vmem %s247, 512 [#allocation10]
        %953 = vst [vmem:[%s952] sm:$0xff] %v920
        %954 = vst [vmem:[%s952 + $0x8] sm:$0xff] %v921
        %955 = vst [vmem:[%s952 + $0x10] sm:$0xff] %v922
        %956 = vst [vmem:[%s952 + $0x18] sm:$0xff] %v923
        %957 = vst [vmem:[%s952 + $0x20] sm:$0xff] %v924
        %958 = vst [vmem:[%s952 + $0x28] sm:$0xff] %v925
        %959 = vst [vmem:[%s952 + $0x30] sm:$0xff] %v926
        %960 = vst [vmem:[%s952 + $0x38] sm:$0xff] %v927
        %961 = vst [vmem:[%s952 + $0x40] sm:$0xff] %v928
        %962 = vst [vmem:[%s952 + $0x48] sm:$0xff] %v929
        %963 = vst [vmem:[%s952 + $0x50] sm:$0xff] %v930
        %964 = vst [vmem:[%s952 + $0x58] sm:$0xff] %v931
        %965 = vst [vmem:[%s952 + $0x60] sm:$0xff] %v932
        %966 = vst [vmem:[%s952 + $0x68] sm:$0xff] %v933
        %967 = vst [vmem:[%s952 + $0x70] sm:$0xff] %v934
        %968 = vst [vmem:[%s952 + $0x78] sm:$0xff] %v935
        %969 = vst [vmem:[%s952 + $0x80] sm:$0xff] %v936
        %970 = vst [vmem:[%s952 + $0x88] sm:$0xff] %v937
        %971 = vst [vmem:[%s952 + $0x90] sm:$0xff] %v938
        %972 = vst [vmem:[%s952 + $0x98] sm:$0xff] %v939
        %973 = vst [vmem:[%s952 + $0xa0] sm:$0xff] %v940
        %974 = vst [vmem:[%s952 + $0xa8] sm:$0xff] %v941
        %975 = vst [vmem:[%s952 + $0xb0] sm:$0xff] %v942
        %976 = vst [vmem:[%s952 + $0xb8] sm:$0xff] %v943
        %977 = vst [vmem:[%s952 + $0xc0] sm:$0xff] %v944
        %978 = vst [vmem:[%s952 + $0xc8] sm:$0xff] %v945
        %979 = vst [vmem:[%s952 + $0xd0] sm:$0xff] %v946
        %980 = vst [vmem:[%s952 + $0xd8] sm:$0xff] %v947
        %981 = vst [vmem:[%s952 + $0xe0] sm:$0xff] %v948
        %982 = vst [vmem:[%s952 + $0xe8] sm:$0xff] %v949
        %983 = vst [vmem:[%s952 + $0xf0] sm:$0xff] %v950
        %984 = vst [vmem:[%s952 + $0xf8] sm:$0xff] %v951
        %s985 = sld [smem:[#allocation6 + $0x3]]
        %v986 = vstv %s985
        %v987 = vmul.f32 %v753, %v986
        %v988 = vmul.f32 %v754, %v986
        %v989 = vmul.f32 %v755, %v986
        %v990 = vmul.f32 %v756, %v986
        %v991 = vmul.f32 %v757, %v986
        %v992 = vmul.f32 %v758, %v986
        %v993 = vmul.f32 %v759, %v986
        %v994 = vmul.f32 %v760, %v986
        %v995 = vmul.f32 %v761, %v986
        %v996 = vmul.f32 %v762, %v986
        %v997 = vmul.f32 %v763, %v986
        %v998 = vmul.f32 %v764, %v986
        %v999 = vmul.f32 %v765, %v986
        %v1000 = vmul.f32 %v766, %v986
        %v1001 = vmul.f32 %v767, %v986
        %v1002 = vmul.f32 %v768, %v986
        %v1003 = vmul.f32 %v769, %v986
        %v1004 = vmul.f32 %v770, %v986
        %v1005 = vmul.f32 %v771, %v986
        %v1006 = vmul.f32 %v772, %v986
        %v1007 = vmul.f32 %v773, %v986
        %v1008 = vmul.f32 %v774, %v986
        %v1009 = vmul.f32 %v775, %v986
        %v1010 = vmul.f32 %v776, %v986
        %v1011 = vmul.f32 %v777, %v986
        %v1012 = vmul.f32 %v778, %v986
        %v1013 = vmul.f32 %v779, %v986
        %v1014 = vmul.f32 %v780, %v986
        %v1015 = vmul.f32 %v781, %v986
        %v1016 = vmul.f32 %v782, %v986
        %v1017 = vmul.f32 %v783, %v986
        %v1018 = vmul.f32 %v784, %v986
        %s1019 = scalar_lea.vmem %s247, 768 [#allocation10]
        %1020 = vst [vmem:[%s1019] sm:$0xff] %v987
        %1021 = vst [vmem:[%s1019 + $0x8] sm:$0xff] %v988
        %1022 = vst [vmem:[%s1019 + $0x10] sm:$0xff] %v989
        %1023 = vst [vmem:[%s1019 + $0x18] sm:$0xff] %v990
        %1024 = vst [vmem:[%s1019 + $0x20] sm:$0xff] %v991
        %1025 = vst [vmem:[%s1019 + $0x28] sm:$0xff] %v992
        %1026 = vst [vmem:[%s1019 + $0x30] sm:$0xff] %v993
        %1027 = vst [vmem:[%s1019 + $0x38] sm:$0xff] %v994
        %1028 = vst [vmem:[%s1019 + $0x40] sm:$0xff] %v995
        %1029 = vst [vmem:[%s1019 + $0x48] sm:$0xff] %v996
        %1030 = vst [vmem:[%s1019 + $0x50] sm:$0xff] %v997
        %1031 = vst [vmem:[%s1019 + $0x58] sm:$0xff] %v998
        %1032 = vst [vmem:[%s1019 + $0x60] sm:$0xff] %v999
        %1033 = vst [vmem:[%s1019 + $0x68] sm:$0xff] %v1000
        %1034 = vst [vmem:[%s1019 + $0x70] sm:$0xff] %v1001
        %1035 = vst [vmem:[%s1019 + $0x78] sm:$0xff] %v1002
        %1036 = vst [vmem:[%s1019 + $0x80] sm:$0xff] %v1003
        %1037 = vst [vmem:[%s1019 + $0x88] sm:$0xff] %v1004
        %1038 = vst [vmem:[%s1019 + $0x90] sm:$0xff] %v1005
        %1039 = vst [vmem:[%s1019 + $0x98] sm:$0xff] %v1006
        %1040 = vst [vmem:[%s1019 + $0xa0] sm:$0xff] %v1007
        %1041 = vst [vmem:[%s1019 + $0xa8] sm:$0xff] %v1008
        %1042 = vst [vmem:[%s1019 + $0xb0] sm:$0xff] %v1009
        %1043 = vst [vmem:[%s1019 + $0xb8] sm:$0xff] %v1010
        %1044 = vst [vmem:[%s1019 + $0xc0] sm:$0xff] %v1011
        %1045 = vst [vmem:[%s1019 + $0xc8] sm:$0xff] %v1012
        %1046 = vst [vmem:[%s1019 + $0xd0] sm:$0xff] %v1013
        %1047 = vst [vmem:[%s1019 + $0xd8] sm:$0xff] %v1014
        %1048 = vst [vmem:[%s1019 + $0xe0] sm:$0xff] %v1015
        %1049 = vst [vmem:[%s1019 + $0xe8] sm:$0xff] %v1016
        %1050 = vst [vmem:[%s1019 + $0xf0] sm:$0xff] %v1017
        %1051 = vst [vmem:[%s1019 + $0xf8] sm:$0xff] %v1018
        %s1052 = sand.u32 %s96, 1
        %s1053 = scalar_lea.sflag [#allocation4], %s1052
        %s1054 = sand.u32 %s96, 1
        %s1055 = smul.addr %s1054, 8
        %s1056 = scalar_lea.vmem [#allocation7], %s1055
        %s1057 = sand.u32 %s25, 1
        %s1058 = scalar_lea.sflag [#allocation9], %s1057
        %s1059 = sand.u32 %s122, 1
        %s1060 = smul.addr %s1059, 8
        %s1061 = scalar_lea.vmem [#allocation8], %s1060
        %s1062 = sand.u32 %s25, 1
        %s1063 = scalar_lea.sflag [#allocation9], %s1062
        %s1064 = sand.u32 %s148, 1
        %s1065 = smul.addr %s1064, 1024
        %s1066 = scalar_lea.vmem [#allocation10], %s1065
        // Predicated region
        $region41: #{tpu_custom_call.1} parent=31 // pred_check
          %p1067 = pneg %p106
        $region42: #{tpu_custom_call.1} parent=31 // pred_check_branch
          %1069 = sbr.rel (%p1067) target = $region44
        $region43: #{tpu_custom_call.1} parent=31 // pred_region
          %s1071 = ssub.s32 128, 128
          %1072 = vsyncadd %s1053, %s1071
          %s1073 = smul.addr %s25, 128
          %s1074 = scalar_lea.hbm %s3, %s1073
          %s1076 = sshll.u32 %s1056, 4
          %s1077 = int_to_ptr.vmem [resolvable:$true] %s1076
          %1079 = dma.vmem_to_hbm [thread:$0]  %s1077, 128, %s1074, %s1053
        $region44: #{tpu_custom_call.1} parent=31 // pred_fallthru
          _
        // Predicated region
        $region45: #{tpu_custom_call.1} parent=31 // pred_check
          %p1080 = pneg %p132
        $region46: #{tpu_custom_call.1} parent=31 // pred_check_branch
          %1082 = sbr.rel (%p1080) target = $region48
        $region47: #{tpu_custom_call.1} parent=31 // pred_region
          %s1084 = ssub.s32 128, 128
          %1085 = vsyncadd %s1058, %s1084
          %s1086 = smul.addr %s25, 128
          %s1087 = scalar_lea.hbm %s4, %s1086
          %s1089 = sshll.u32 %s1061, 4
          %s1090 = int_to_ptr.vmem [resolvable:$true] %s1089
          %1092 = dma.vmem_to_hbm [thread:$0]  %s1090, 128, %s1087, %s1058
        $region48: #{tpu_custom_call.1} parent=31 // pred_fallthru
          _
        // Predicated region
        $region49: #{tpu_custom_call.1} parent=31 // pred_check
          %p1093 = pneg %p158
        $region50: #{tpu_custom_call.1} parent=31 // pred_check_branch
          %1095 = sbr.rel (%p1093) target = $region52
        $region51: #{tpu_custom_call.1} parent=31 // pred_region
          #allocation12 [shape = 'u32[6]{0}', space=smem, size = 0x18, scoped, tag = 'DMA stride descriptor']
          %s1096 = smul.u32 16, %s25
          %s1098 = ssub.s32 16384, 16384
          %1099 = vsyncadd %s1063, %s1098
          %s1100 = smul.addr %s1096, 2
          %s1101 = smul.addr %s1100, 128
          %s1102 = scalar_lea.hbm %s5, %s1101
          %s1104 = sshll.u32 1, 14
          %s1105 = sxor.u32 4294967295, %s1104
          %s1108 = sshll.u32 7, 18
          %s1109 = sxor.u32 4294967295, %s1108
          %s1110 = sand.u32 0, %s1109
          %s1112 = sor.u32 %s1110, 0
          %s1114 = sshll.u32 3, 24
          %s1115 = sxor.u32 4294967295, %s1114
          %s1116 = sand.u32 %s1112, %s1115
          %s1118 = sor.u32 %s1116, 0
          %s1119 = sshll.u32 %s1066, 4
          %s1120 = int_to_ptr.vmem [resolvable:$true] %s1119
          %1126 = sst [smem:[#allocation12]] 4096
          %s1127 = scalar_lea.smem [#allocation12], 1
          %1128 = sst [smem:[%s1127]] 8192
          %s1129 = scalar_lea.smem [#allocation12], 2
          %1130 = sst [smem:[%s1129]] 16
          %s1131 = scalar_lea.smem [#allocation12], 3
          %1132 = sst [smem:[%s1131]] 256
          %s1133 = scalar_lea.smem [#allocation12], 4
          %1134 = sst [smem:[%s1133]] 256
          %s1135 = scalar_lea.smem [#allocation12], 5
          %1136 = sst [smem:[%s1135]] 16
          %1138 = dma.general %s1120, 16384, %s1102, %s1063, [#allocation11], [#allocation12], %s1118, 0
        $region52: #{tpu_custom_call.1} parent=31 // pred_fallthru
          _
      $region32: #{tpu_custom_call.1} parent=5 // pred_fallthru
        _
      %p1139 = scmp.le.s32.totalorder 2, %s20
      // Predicated region
      $region53: #{tpu_custom_call.1} parent=5 // pred_check
        %p1140 = pneg %p1139
      $region54: #{tpu_custom_call.1} parent=5 // pred_check_branch
        %1142 = sbr.rel (%p1140) target = $region56
      $region55: #{tpu_custom_call.1} parent=5 // pred_region
        %s1143 = ssub.s32 %s20, 2
        // Predicated region
        $region57: #{tpu_custom_call.1} parent=55 // pred_check
          %p1144 = pneg %p112
        $region58: #{tpu_custom_call.1} parent=55 // pred_check_branch
          %1146 = sbr.rel (%p1144) target = $region60
        $region59: #{tpu_custom_call.1} parent=55 // pred_region
          %s1147 = sand.u32 %s97, 1
          %s1148 = scalar_lea.sflag [#allocation4], %s1147
          %s1149 = sand.u32 %s97, 1
          %s1150 = smul.addr %s1149, 8
          %s1151 = scalar_lea.vmem [#allocation7], %s1150
          %1152 = dma.done %s1148, 128
        $region60: #{tpu_custom_call.1} parent=55 // pred_fallthru
          _
        // Predicated region
        $region61: #{tpu_custom_call.1} parent=55 // pred_check
          %p1153 = pneg %p138
        $region62: #{tpu_custom_call.1} parent=55 // pred_check_branch
          %1155 = sbr.rel (%p1153) target = $region64
        $region63: #{tpu_custom_call.1} parent=55 // pred_region
          %s1156 = sand.u32 %s26, 1
          %s1157 = scalar_lea.sflag [#allocation9], %s1156
          %s1158 = sand.u32 %s123, 1
          %s1159 = smul.addr %s1158, 8
          %s1160 = scalar_lea.vmem [#allocation8], %s1159
          %1161 = dma.done %s1157, 128
        $region64: #{tpu_custom_call.1} parent=55 // pred_fallthru
          _
        // Predicated region
        $region65: #{tpu_custom_call.1} parent=55 // pred_check
          %p1162 = pneg %p164
        $region66: #{tpu_custom_call.1} parent=55 // pred_check_branch
          %1164 = sbr.rel (%p1162) target = $region68
        $region67: #{tpu_custom_call.1} parent=55 // pred_region
          %s1165 = sand.u32 %s26, 1
          %s1166 = scalar_lea.sflag [#allocation9], %s1165
          %s1167 = sand.u32 %s149, 1
          %s1168 = smul.addr %s1167, 1024
          %s1169 = scalar_lea.vmem [#allocation10], %s1168
          %1170 = dma.done %s1166, 16384
        $region68: #{tpu_custom_call.1} parent=55 // pred_fallthru
          _
      $region56: #{tpu_custom_call.1} parent=5 // pred_fallthru
        _
    $region6: #{tpu_custom_call.1} parent=1 // loop_footer
      %s24 = sadd.s32 1, %s20
    $region7: #{tpu_custom_call.1} parent=1 // loop_footer_branch
      %19 = sbr.rel target = $region3
    $region8: #{tpu_custom_call.1} parent=1 // loop_exit
      _
    %1171 = vsyncpa [#allocation3], 1
    %s1172 = scalar_lea.sflag [#allocation3], 1
    %1173 = vsyncpa %s1172, 1
    %1174 = vsyncpa [#allocation4], 1
    %s1175 = scalar_lea.sflag [#allocation4], 1
    %1176 = vsyncpa %s1175, 1
    %1177 = vsyncpa [#allocation9], 1
    %s1178 = scalar_lea.sflag [#allocation9], 1
    %1179 = vsyncpa %s1178, 1
    %1180 = vsyncpa [#allocation5], 1
    %s1181 = scalar_lea.sflag [#allocation5], 1
    %1182 = vsyncpa %s1181, 1

</llo_original>
